<compile_context>
chip_gen: v7x
topology: tpu7x:2x2x1
jax: 0.10.0
libtpu: 0.0.40
codegen_flags: <defaults>
</compile_context>

<pallas_src>
import jax
import jax.numpy as jnp
import numpy as np
from jax.experimental import pallas as pl
from jax.experimental.pallas import tpu as pltpu


def a_to_b_scheduler(step, A, B, gamma=10.0, max_iter=10000.0):
    """A + (2/(1+exp(-gamma*step/max_iter)) - 1) * (B - A)  (scalar glue)."""
    ans = A + (2.0 / (1.0 + np.exp(-gamma * step * 1.0 / max_iter)) - 1.0) * (B - A)
    return float(ans)


# --------------------- Pallas kernel: backward grad scale --------------------

def _neg_scale_kernel(neg_coeff_ref, g_ref, o_ref):
    # grad_input = -coeff * grad_output.  Scalar stays in f32 (like PyTorch's
    # fp32 scalar multiply); result is cast back to the gradient dtype.
    o_ref[...] = (neg_coeff_ref[0] * g_ref[...].astype(jnp.float32)).astype(o_ref.dtype)


def _lane_dense_cols(n):
    """Pick (cols, pad) so n(+pad) reshapes to a lane-dense (rows, cols) slab."""
    for c in (1024, 512, 256, 128):
        if n % c == 0:
            return c, 0
    # Awkward sizes: pad the flat vector up to a multiple of 128 lanes.
    # TODO(synk): the pad/slice costs one extra elementwise pass for such shapes.
    pad = (-n) % 128
    return 128, pad


def _block_rows(rows, cols, itemsize):
    sub = max(8, 32 // itemsize)            # f32: 8, bf16: 16, int8/fp8: 32 sublanes
    target = max(sub, (4 * 1024 * 1024) // (cols * itemsize))   # ~4 MiB tiles
    target -= target % sub
    if rows > target:
        return target
    if rows >= 2 * sub:
        # keep >= 2 grid steps so the parallel axis can shard across v7x's 2 TCs
        half = -(-rows // 2)                # ceil(rows / 2)
        half += (-half) % sub               # round up to sublane multiple
        return min(half, rows)
    return rows                             # small input: full extent block


def _pallas_neg_scale(g, coeff):
    """-coeff * g, computed as one lane-dense memory-bound Pallas pass."""
    orig_shape, dtype = g.shape, g.dtype
    n = int(np.prod(orig_shape))
    itemsize = jnp.dtype(dtype).itemsize

    cols, pad = _lane_dense_cols(n)
    flat = g.reshape(-1)
    if pad:
        flat = jnp.pad(flat, (0, pad))
    rows = flat.size // cols
    g2d = flat.reshape(rows, cols)

    br = _block_rows(rows, cols, itemsize)
    grid = (pl.cdiv(rows, br),)
    neg_coeff = jnp.asarray(-coeff, jnp.float32).reshape(1)

    out = pl.pallas_call(
        _neg_scale_kernel,
        out_shape=jax.ShapeDtypeStruct((rows, cols), dtype),
        grid_spec=pltpu.PrefetchScalarGridSpec(
            num_scalar_prefetch=0,
            grid=grid,
            in_specs=[
                pl.BlockSpec(memory_space=pltpu.SMEM),        # -coeff scalar
                pl.BlockSpec((br, cols), lambda i: (i, 0)),   # gradient tile
            ],
            out_specs=pl.BlockSpec((br, cols), lambda i: (i, 0)),
        ),
        compiler_params=pltpu.CompilerParams(
            dimension_semantics=("parallel",),
            # covers double-buffered in + out ~4 MiB tiles on all generations
            vmem_limit_bytes=32 * 1024 * 1024,
        ),
    )(neg_coeff, g2d)

    out = out.reshape(-1)
    if pad:
        out = out[:n]
    return out.reshape(orig_shape)


# ------------------------- gradient-reverse wrapper --------------------------

@jax.custom_vjp
def _gradient_reverse(x, coeff):
    # GradientReverseLayer.forward: x.view_as(x) -> identity, no data movement,
    # no HBM traffic (per perf review: no identity-copy kernel).
    del coeff
    return x


def _gr_fwd(x, coeff):
    return x, coeff


def _gr_bwd(coeff, g):
    # GradientReverseLayer.backward: (-coeff * grad_output, None)
    return _pallas_neg_scale(g, coeff), jnp.zeros_like(coeff)


_gradient_reverse.defvjp(_gr_fwd, _gr_bwd)


def gradient_reverse(x, coeff):
    # coeff is a traced f32 scalar (not a static arg) -> no per-step retracing.
    return _gradient_reverse(x, jnp.asarray(coeff, jnp.float32))


# --------------------------------- module ------------------------------------

class AdversarialNetwork:
    """JAX/Pallas port of AdversarialNetwork (empty nn.Sequential `main`)."""

    def __init__(self):
        self.global_step = 0.0
        self.scheduler = lambda step: a_to_b_scheduler(
            step, 0.0, 1.0, gamma=10, max_iter=10000
        )
        # `main` is an empty nn.Sequential -> identity, no parameters.
        # TODO(synk): if layers are ever added to `main`, initialize and fuse
        # them into a Pallas kernel here.

    def forward(self, x):
        # NOTE: coeff changes every call via Python state; when wrapping in
        # jax.jit, pass the step / coeff in as a traced argument instead of
        # relying on this Python-side mutation (avoids stale-constant capture).
        coeff = jnp.float32(self.scheduler(self.global_step))
        self.global_step += 1.0
        x = gradient_reverse(x, coeff)   # identity fwd, -coeff * grad bwd
        # empty nn.Sequential -> identity
        return x

    __call__ = forward


# ---------------------------------- main -------------------------------------

if __name__ == "__main__":
    key = jax.random.PRNGKey(0)
    kx, kg = jax.random.split(key)
    # NCHW input, same convention as the PyTorch module.
    x = jax.random.normal(kx, (2, 4, 16, 16), dtype=jnp.float32)

    # Forward: pure identity (view_as + empty Sequential), zero HBM traffic.
    net = AdversarialNetwork()
    out = jax.block_until_ready(net(x))
    assert out.shape == x.shape and out.dtype == x.dtype
    np.testing.assert_allclose(np.asarray(out), np.asarray(x), rtol=0, atol=0)

    # Backward: exercise the Pallas gradient-reversal kernel once and verify
    # grad_in == -coeff * grad_out.
    coeff = jnp.float32(a_to_b_scheduler(500.0, 0.0, 1.0))   # nonzero coefficient
    g = jax.random.normal(kg, x.shape, dtype=x.dtype)
    _, vjp_fn = jax.vjp(lambda v: gradient_reverse(v, coeff), x)
    (dx,) = vjp_fn(g)
    dx = jax.block_until_ready(dx)
    np.testing.assert_allclose(
        np.asarray(dx), -float(coeff) * np.asarray(g), rtol=1e-6, atol=1e-6
    )

    print("KERNEL_OK")
</pallas_src>

<mosaic_0001>
module attributes {stable_mosaic.version = 11 : i64} {
  func.func @_neg_scale_kernel(%arg0: i32, %arg1: memref<1xf32, #tpu.memory_space<smem>>, %arg2: memref<2x1024xf32, #tpu.memory_space<vmem>>, %arg3: memref<2x1024xf32, #tpu.memory_space<vmem>>) attributes {dimension_semantics = [#tpu.dimension_semantics<parallel>], iteration_bounds = array<i64: 1>, scalar_prefetch = 0 : i64, scratch_operands = 0 : i64, tpu.core_type = #tpu.core_type<tc>, window_params = [{transform_indices = @transform_0, window_bounds = array<i64: 1>}, {transform_indices = @transform_1, window_bounds = array<i64: 2, 1024>}, {transform_indices = @transform_2, window_bounds = array<i64: 2, 1024>}]} {
    %c0 = arith.constant 0 : index
    %0 = memref.load %arg1[%c0] : memref<1xf32, #tpu.memory_space<smem>>
    %c0_0 = arith.constant 0 : index
    %c0_1 = arith.constant 0 : index
    %1 = vector.load %arg2[%c0_0, %c0_1] : memref<2x1024xf32, #tpu.memory_space<vmem>>, vector<2x1024xf32>
    %2 = vector.broadcast %0 : f32 to vector<2x1024xf32>
    %3 = arith.mulf %2, %1 : vector<2x1024xf32>
    %c0_2 = arith.constant 0 : index
    %c0_3 = arith.constant 0 : index
    %4 = vector.load %arg3[%c0_2, %c0_3] : memref<2x1024xf32, #tpu.memory_space<vmem>>, vector<2x1024xf32>
    tpu.vector_store %arg3[%c0_2, %c0_3], %3 {strides = array<i32>} : memref<2x1024xf32, #tpu.memory_space<vmem>>, vector<2x1024xf32>,
    return
  }
  func.func @transform_0(%arg0: i32) -> i32 {
    %c0_i32 = arith.constant 0 : i32
    %c0_i32_0 = arith.constant 0 : i32
    return %c0_i32 : i32
  }
  func.func @transform_1(%arg0: i32) -> (i32, i32) {
    %c0_i32 = arith.constant 0 : i32
    %c0_i32_0 = arith.constant 0 : i32
    return %arg0, %c0_i32 : i32, i32
  }
  func.func @transform_2(%arg0: i32) -> (i32, i32) {
    %c0_i32 = arith.constant 0 : i32
    %c0_i32_0 = arith.constant 0 : i32
    return %arg0, %c0_i32 : i32, i32
  }
}

</mosaic_0001>

<llo_original>
// kernel: tpu_custom_call.1
$region0: #{tpu_custom_call.1}
  #allocation0 [shape = 'u32[]', space=smem, size = 0x4, offset = 0x4, fixed_abs, tag = 'smem constant byte address 0x4 - core index']
  #allocation1 [shape = 'u32[144,128]{1,0:T(1,128)}', space=vmem, size = 0x12000, scoped, tag = 'internal scratch']
  #allocation2 [shape = 'f32[1]{0:T(128)S(6)}', space=smem, size = 0x200, scoped, tag = 'scoped memory for tpu_custom_call.1']
  %s0 = inlined_call_operand.<no memory space> [shape: f32[1], index: 0, kind: input, shape index: {}]
  %s1 = inlined_call_operand.hbm [shape: f32[2,1024], index: 1, kind: input, shape index: {}]
  %s2 = inlined_call_operand.hbm [shape: f32[2,1024], index: 2, kind: output, shape index: {}]
  %s3 = sld [smem:[#allocation0]]
  $region22: #{tpu_custom_call.1} parent=0
    _
  %s5 = ssub.s32 1, %s3
  %s6 = scalar_select 0, %s5, %s3
  %7 = sst [smem:[#allocation2]] %s0
  $region1: #{tpu_custom_call.1} parent=0
    #allocation3 [shape = 'u8[8192]{0}', space=vmem, size = 0x2000, scoped, tag = 'input window, operand 1, single buffered']
    #allocation4 [shape = 's32[1]{0}', space=sflag, size = 0x4, scoped, tag = 'scoped memory for tpu_custom_call.1']
    #allocation5 [shape = 's32[1]{0}', space=sflag, size = 0x4, scoped, tag = 'scoped memory for tpu_custom_call.1']
    #allocation6 [shape = 'u8[8192]{0}', space=vmem, size = 0x2000, scoped, tag = 'output window, operand 0, single buffered']
    %8 = vsyncpa [#allocation4], 0
    %9 = vsyncpa [#allocation5], 0
    // Predicated region
    $region2: #{tpu_custom_call.1} parent=1 // pred_check
      _
    $region3: #{tpu_custom_call.1} parent=1 // pred_check_branch
      %11 = sbr.rel (0) target = $region5
    $region4: #{tpu_custom_call.1} parent=1 // pred_region
      _
    $region5: #{tpu_custom_call.1} parent=1 // pred_fallthru
      _
    // Predicated region
    $region6: #{tpu_custom_call.1} parent=1 // pred_check
      _
    $region7: #{tpu_custom_call.1} parent=1 // pred_check_branch
      %13 = sbr.rel (0) target = $region9
    $region8: #{tpu_custom_call.1} parent=1 // pred_region
      %s15 = ssub.s32 256, 256
      %16 = vsyncadd [#allocation4], %s15
      %s18 = sshll.u32 [#allocation3], 4
      %s19 = int_to_ptr.vmem [resolvable:$true] %s18
      %21 = dma.hbm_to_vmem [thread:$0]  %s1, 256, %s19, [#allocation4]
    $region9: #{tpu_custom_call.1} parent=1 // pred_fallthru
      _
    // Predicated region
    $region10: #{tpu_custom_call.1} parent=1 // pred_check
      _
    $region11: #{tpu_custom_call.1} parent=1 // pred_check_branch
      %23 = sbr.rel (0) target = $region13
    $region12: #{tpu_custom_call.1} parent=1 // pred_region
      %24 = dma.done [#allocation4], 256
    $region13: #{tpu_custom_call.1} parent=1 // pred_fallthru
      _
    %s25 = sld [smem:[#allocation2]]
    %v26 = vld [vmem:[#allocation3] sm:$0xff]
    %v27 = vld [vmem:[#allocation3 + $0x8] sm:$0xff]
    %v28 = vstv %s25
    %v29 = vmul.f32 %v28, %v26
    %v30 = vmul.f32 %v28, %v27
    %31 = vst [vmem:[#allocation6] sm:$0xff] %v29
    %32 = vst [vmem:[#allocation6 + $0x8] sm:$0xff] %v30
    // Predicated region
    $region14: #{tpu_custom_call.1} parent=1 // pred_check
      _
    $region15: #{tpu_custom_call.1} parent=1 // pred_check_branch
      %34 = sbr.rel (0) target = $region17
    $region16: #{tpu_custom_call.1} parent=1 // pred_region
      %s36 = ssub.s32 256, 256
      %37 = vsyncadd [#allocation5], %s36
      %s39 = sshll.u32 [#allocation6], 4
      %s40 = int_to_ptr.vmem [resolvable:$true] %s39
      %42 = dma.vmem_to_hbm [thread:$0]  %s40, 256, %s2, [#allocation5]
    $region17: #{tpu_custom_call.1} parent=1 // pred_fallthru
      _
    // Predicated region
    $region18: #{tpu_custom_call.1} parent=1 // pred_check
      _
    $region19: #{tpu_custom_call.1} parent=1 // pred_check_branch
      %44 = sbr.rel (0) target = $region21
    $region20: #{tpu_custom_call.1} parent=1 // pred_region
      %45 = dma.done [#allocation5], 256
    $region21: #{tpu_custom_call.1} parent=1 // pred_fallthru
      _
    %46 = vsyncpa [#allocation4], 1
    %47 = vsyncpa [#allocation5], 1

</llo_original>
